<compile_context>
chip_gen: v5e
topology: v5e:2x2
jax: 0.10.0
libtpu: 0.0.40
codegen_flags: <defaults>
</compile_context>

<pallas_src>
import functools

import jax
import jax.numpy as jnp
from jax.experimental import pallas as pl
from jax.experimental.pallas import tpu as pltpu

_EPS = 1e-5
_SMALL_ARRAY_BYTES = 2 * 1024 * 1024   # below this, don't force multi-step grids


# --------------------------------------------------------------------------- #
# Generation-aware configuration & tile picking
# --------------------------------------------------------------------------- #
@functools.lru_cache(maxsize=None)
def _tpu_config():
    """Returns (vmem_limit_bytes, tile_budget_bytes, num_tensorcores)."""
    kind = ""
    try:
        kind = (jax.devices()[0].device_kind or "").lower()
    except Exception:
        pass
    num_cores = 2 if ("v7" in kind or "7x" in kind) else 1
    vmem_cap = 64 * 1024 * 1024 if num_cores == 2 else 128 * 1024 * 1024
    try:
        vmem_cap = int(getattr(pltpu.get_tpu_info(), "vmem_capacity_bytes", vmem_cap))
    except Exception:
        pass
    if vmem_cap <= 64 * 1024 * 1024:            # v7x-class: 64 MiB per TC
        return 48 * 1024 * 1024, 6 * 1024 * 1024, num_cores
    return 96 * 1024 * 1024, 12 * 1024 * 1024, num_cores   # v5e / v6e: 128 MiB


def _compiler_params(dimension_semantics):
    vmem_limit, _, _ = _tpu_config()
    return pltpu.CompilerParams(
        dimension_semantics=dimension_semantics,
        vmem_limit_bytes=vmem_limit,
    )


def _cost(numel, n_stats, itemsize):
    return pl.CostEstimate(
        flops=int(7 * numel),
        transcendentals=int(n_stats),
        bytes_accessed=int(2 * numel * itemsize),
    )


def _sublane_multiple(dtype):
    # f32 -> 8, bf16/f16 -> 16, int8/fp8 -> 32 (sublane packing).
    return max(8, 32 // jnp.dtype(dtype).itemsize)


def _divisors(n):
    small, large = [], []
    d = 1
    while d * d <= n:
        if n % d == 0:
            small.append(d)
            if d != n // d:
                large.append(n // d)
        d += 1
    return small + large[::-1]


def _legal_tiles(total, multiple_of):
    """Divisors of `total` that are legal block extents (ascending)."""
    return [t for t in _divisors(total) if t % multiple_of == 0 or t == total]


def _pick_tile(total, bytes_per_unit, *, multiple_of, budget, min_grid=1,
               prefer_even_grid=False):
    """Largest legal tile fitting `budget`, preferring grids with >= min_grid
    (and even length on 2-core parts) when the whole axis is big enough to
    matter.  Returns the smallest legal tile when nothing fits (caller may
    switch to the split-reduction path)."""
    cands = _legal_tiles(total, multiple_of)
    fitting = [t for t in cands if t * bytes_per_unit <= budget]
    if not fitting:
        return cands[0]
    if total * bytes_per_unit > _SMALL_ARRAY_BYTES:
        multi = [t for t in fitting if total // t >= min_grid]
        if multi:
            fitting = multi
        if prefer_even_grid:
            even = [t for t in fitting if (total // t) % 2 == 0]
            if even:
                fitting = even
    return max(fitting)


# --------------------------------------------------------------------------- #
# Kernels (f32 accumulation, fused single-sweep sum / sum-of-squares)
# --------------------------------------------------------------------------- #
def _batch_norm_kernel(x_ref, g_ref, b_ref, o_ref, *, eps, inv_count):
    """x_ref: (N, TC, HW); g_ref/b_ref: (TC, 1). Stats over (N, HW) per channel."""
    x = x_ref[...].astype(jnp.float32)
    s = jnp.sum(x, axis=2, keepdims=True)                     # (N, TC, 1) lane reduce
    ss = jnp.sum(x * x, axis=2, keepdims=True)
    mean = jnp.sum(s, axis=0, keepdims=True) * inv_count      # (1, TC, 1)
    var = jnp.sum(ss, axis=0, keepdims=True) * inv_count - mean * mean
    var = jnp.maximum(var, 0.0)
    g = g_ref[...].astype(jnp.float32)[None, :, :]
    b = b_ref[...].astype(jnp.float32)[None, :, :]
    scale = jax.lax.rsqrt(var + eps) * g
    o_ref[...] = ((x - mean) * scale + b).astype(o_ref.dtype)


def _row_norm_kernel(x_ref, o_ref, *, eps, inv_count):
    """x_ref: (TR, K). Per-row stats over K. No affine (instance norm)."""
    x = x_ref[...].astype(jnp.float32)
    mean = jnp.sum(x, axis=1, keepdims=True) * inv_count
    var = jnp.sum(x * x, axis=1, keepdims=True) * inv_count - mean * mean
    var = jnp.maximum(var, 0.0)
    o_ref[...] = ((x - mean) * jax.lax.rsqrt(var + eps)).astype(o_ref.dtype)


def _row_norm_affine_kernel(x_ref, g_ref, b_ref, o_ref, *, eps, inv_count):
    """x_ref: (TR, K); g_ref/b_ref: (1, K) lane-dense per-column affine."""
    x = x_ref[...].astype(jnp.float32)
    mean = jnp.sum(x, axis=1, keepdims=True) * inv_count
    var = jnp.sum(x * x, axis=1, keepdims=True) * inv_count - mean * mean
    var = jnp.maximum(var, 0.0)
    y = (x - mean) * jax.lax.rsqrt(var + eps)
    o_ref[...] = (y * g_ref[...] + b_ref[...]).astype(o_ref.dtype)


def _row_stats_kernel(x_ref, mean_ref, rstd_ref, *, eps, inv_count):
    """Split-K pass 1: accumulate per-row sum / sum-of-squares over the K grid
    axis (the 'arbitrary' axis), finalize to (mean, rstd).  The two output refs
    double as accumulators (constant block index across K)."""
    k = pl.program_id(1)
    x = x_ref[...].astype(jnp.float32)
    ps = jnp.sum(x, axis=1, keepdims=True)
    pss = jnp.sum(x * x, axis=1, keepdims=True)

    @pl.when(k == 0)
    def _():
        mean_ref[...] = ps
        rstd_ref[...] = pss

    @pl.when(k > 0)
    def _():
        mean_ref[...] += ps
        rstd_ref[...] += pss

    @pl.when(k == pl.num_programs(1) - 1)
    def _():
        mean = mean_ref[...] * inv_count
        var = jnp.maximum(rstd_ref[...] * inv_count - mean * mean, 0.0)
        mean_ref[...] = mean
        rstd_ref[...] = jax.lax.rsqrt(var + eps)


def _row_apply_kernel(x_ref, mean_ref, rstd_ref, o_ref):
    x = x_ref[...].astype(jnp.float32)
    o_ref[...] = ((x - mean_ref[...]) * rstd_ref[...]).astype(o_ref.dtype)


def _row_apply_affine_kernel(x_ref, mean_ref, rstd_ref, g_ref, b_ref, o_ref):
    x = x_ref[...].astype(jnp.float32)
    y = (x - mean_ref[...]) * rstd_ref[...]
    o_ref[...] = (y * g_ref[...] + b_ref[...]).astype(o_ref.dtype)


# --------------------------------------------------------------------------- #
# Wrappers (layout plumbing only: free NCHW reshapes, no HBM transposes)
# --------------------------------------------------------------------------- #
def _row_norm(x2, gamma_row, beta_row, *, tile_budget=None):
    """Normalize each row of x2 (R, K); optional per-column affine via (1, K)."""
    R, K = x2.shape
    itemsize = jnp.dtype(x2.dtype).itemsize
    _, default_budget, num_cores = _tpu_config()
    budget = default_budget if tile_budget is None else tile_budget
    sub = _sublane_multiple(x2.dtype)
    per_elem = 2 * itemsize + 8                   # in + out + f32 working copy
    min_grid = 2 * num_cores
    prefer_even = num_cores == 2
    affine = gamma_row is not None

    tr = _pick_tile(R, K * per_elem, multiple_of=sub, budget=budget,
                    min_grid=min_grid, prefer_even_grid=prefer_even)

    if tr * K * per_elem <= budget:
        # One-pass fused kernel: single read of x, single write of y.
        grid = (R // tr,)
        in_specs = [pl.BlockSpec((tr, K), lambda i: (i, 0))]
        args = [x2]
        if affine:
            in_specs += [pl.BlockSpec((1, K), lambda i: (0, 0)),
                         pl.BlockSpec((1, K), lambda i: (0, 0))]
            args += [gamma_row, beta_row]
            kern = functools.partial(_row_norm_affine_kernel,
                                     eps=_EPS, inv_count=1.0 / float(K))
        else:
            kern = functools.partial(_row_norm_kernel,
                                     eps=_EPS, inv_count=1.0 / float(K))
        return pl.pallas_call(
            kern,
            out_shape=jax.ShapeDtypeStruct((R, K), x2.dtype),
            grid=grid,
            in_specs=in_specs,
            out_specs=pl.BlockSpec((tr, K), lambda i: (i, 0)),
            compiler_params=_compiler_params(("parallel",)),
            cost_estimate=_cost(R * K, R, itemsize),
        )(*args)

    # Split-K (two-pass): pass 1 accumulates sum / sum-of-squares per row over
    # K tiles, pass 2 normalizes (+ affine).  Keeps blocks in the efficient
    # ~1-8 MiB DMA regime when a whole reduction row does not fit VMEM.
    tk = _pick_tile(K, sub * per_elem, multiple_of=128, budget=budget,
                    min_grid=2, prefer_even_grid=prefer_even)
    tr = _pick_tile(R, tk * per_elem, multiple_of=sub, budget=budget)
    grid = (R // tr, K // tk)

    mean, rstd = pl.pallas_call(
        functools.partial(_row_stats_kernel, eps=_EPS, inv_count=1.0 / float(K)),
        out_shape=(jax.ShapeDtypeStruct((R, 1), jnp.float32),
                   jax.ShapeDtypeStruct((R, 1), jnp.float32)),
        grid=grid,
        in_specs=[pl.BlockSpec((tr, tk), lambda i, k: (i, k))],
        out_specs=(pl.BlockSpec((tr, 1), lambda i, k: (i, 0)),
                   pl.BlockSpec((tr, 1), lambda i, k: (i, 0))),
        compiler_params=_compiler_params(("parallel", "arbitrary")),
        cost_estimate=_cost(R * K, R, itemsize),
    )(x2)

    in_specs = [pl.BlockSpec((tr, tk), lambda i, k: (i, k)),
                pl.BlockSpec((tr, 1), lambda i, k: (i, 0)),
                pl.BlockSpec((tr, 1), lambda i, k: (i, 0))]
    args = [x2, mean, rstd]
    if affine:
        in_specs += [pl.BlockSpec((1, tk), lambda i, k: (0, k)),
                     pl.BlockSpec((1, tk), lambda i, k: (0, k))]
        args += [gamma_row, beta_row]
        kern = _row_apply_affine_kernel
    else:
        kern = _row_apply_kernel
    return pl.pallas_call(
        kern,
        out_shape=jax.ShapeDtypeStruct((R, K), x2.dtype),
        grid=grid,
        in_specs=in_specs,
        out_specs=pl.BlockSpec((tr, tk), lambda i, k: (i, k)),
        compiler_params=_compiler_params(("parallel", "parallel")),
        cost_estimate=_cost(R * K, R, itemsize),
    )(*args)


def _batch_norm(x, gamma, beta, *, tile_budget=None):
    N, C, H, W = x.shape
    HW = H * W
    itemsize = jnp.dtype(x.dtype).itemsize
    _, default_budget, num_cores = _tpu_config()
    budget = default_budget if tile_budget is None else tile_budget
    sub = _sublane_multiple(x.dtype)
    per_chan = N * HW * (2 * itemsize + 8)

    x3 = x.reshape(N, C, HW)
    g2 = gamma.astype(jnp.float32).reshape(C, 1)
    b2 = beta.astype(jnp.float32).reshape(C, 1)

    # TODO(synk): add a split-(N,HW) reduction path (as done for instance/layer
    # via _row_stats_kernel) when a single channel's (N, HW) slab exceeds the
    # VMEM budget; until then we fall back to the full per-channel slab.
    tc = _pick_tile(C, per_chan, multiple_of=sub, budget=budget,
                    min_grid=2 * num_cores, prefer_even_grid=(num_cores == 2))
    grid = (C // tc,)

    y3 = pl.pallas_call(
        functools.partial(_batch_norm_kernel, eps=_EPS,
                          inv_count=1.0 / float(N * HW)),
        out_shape=jax.ShapeDtypeStruct((N, C, HW), x.dtype),
        grid=grid,
        in_specs=[
            pl.BlockSpec((N, tc, HW), lambda i: (0, i, 0)),
            pl.BlockSpec((tc, 1), lambda i: (i, 0)),
            pl.BlockSpec((tc, 1), lambda i: (i, 0)),
        ],
        out_specs=pl.BlockSpec((N, tc, HW), lambda i: (0, i, 0)),
        compiler_params=_compiler_params(("parallel",)),
        cost_estimate=_cost(N * C * HW, C, itemsize),
    )(x3, g2, b2)
    return y3.reshape(N, C, H, W)


def _instance_norm(x, *, tile_budget=None):
    # nn.InstanceNorm2d default: affine=False, track_running_stats=False.
    N, C, H, W = x.shape
    y2 = _row_norm(x.reshape(N * C, H * W), None, None, tile_budget=tile_budget)
    return y2.reshape(N, C, H, W)


def _layer_norm(x, gamma, beta, *, tile_budget=None):
    # GroupNorm(1, C): per-sample stats over (C, H, W), per-channel affine.
    # Lane-dense layout: x -> (N, C*HW); gamma/beta expanded to (1, C*HW) so the
    # per-channel affine becomes per-column affine on the lane axis.
    N, C, H, W = x.shape
    HW = H * W
    g_row = jnp.broadcast_to(
        gamma.astype(jnp.float32)[:, None], (C, HW)).reshape(1, C * HW)
    b_row = jnp.broadcast_to(
        beta.astype(jnp.float32)[:, None], (C, HW)).reshape(1, C * HW)
    y2 = _row_norm(x.reshape(N, C * HW), g_row, b_row, tile_budget=tile_budget)
    return y2.reshape(N, C, H, W)


def norm_layer_forward(x, gamma, beta, norm_type="batch", *, tile_budget=None):
    """Forward pass of NormLayer. x is NCHW, gamma/beta are (C,)."""
    if norm_type == "batch":
        return _batch_norm(x, gamma, beta, tile_budget=tile_budget)
    if norm_type == "instance":
        return _instance_norm(x, tile_budget=tile_budget)
    if norm_type == "layer":
        return _layer_norm(x, gamma, beta, tile_budget=tile_budget)
    raise ValueError(f"Unsupported normalization type: {norm_type}")


# --------------------------------------------------------------------------- #
# Plain-JAX reference (mirrors the PyTorch module) + self-test
# --------------------------------------------------------------------------- #
def _reference(x, gamma, beta, norm_type):
    xf = x.astype(jnp.float32)
    if norm_type == "batch":
        mean = xf.mean(axis=(0, 2, 3), keepdims=True)
        var = xf.var(axis=(0, 2, 3), keepdims=True)
        y = (xf - mean) * jax.lax.rsqrt(var + _EPS)
        return y * gamma[None, :, None, None] + beta[None, :, None, None]
    if norm_type == "instance":
        mean = xf.mean(axis=(2, 3), keepdims=True)
        var = xf.var(axis=(2, 3), keepdims=True)
        return (xf - mean) * jax.lax.rsqrt(var + _EPS)
    if norm_type == "layer":
        mean = xf.mean(axis=(1, 2, 3), keepdims=True)
        var = xf.var(axis=(1, 2, 3), keepdims=True)
        y = (xf - mean) * jax.lax.rsqrt(var + _EPS)
        return y * gamma[None, :, None, None] + beta[None, :, None, None]
    raise ValueError(norm_type)


if __name__ == "__main__":
    key = jax.random.PRNGKey(0)
    k_x, k_g, k_b = jax.random.split(key, 3)
    N, C, H, W = 2, 4, 16, 16
    x = jax.random.normal(k_x, (N, C, H, W), dtype=jnp.float32)
    gamma = 1.0 + 0.1 * jax.random.normal(k_g, (C,), dtype=jnp.float32)
    beta = 0.1 * jax.random.normal(k_b, (C,), dtype=jnp.float32)

    ok = True

    # Default (one-pass) path, all three modes.
    for norm_type in ("batch", "instance", "layer"):
        y = jax.block_until_ready(norm_layer_forward(x, gamma, beta, norm_type))
        y_ref = _reference(x, gamma, beta, norm_type)
        if not jnp.allclose(y, y_ref, atol=1e-4, rtol=1e-4):
            ok = False
            print(f"MISMATCH {norm_type}: max err "
                  f"{float(jnp.abs(y - y_ref).max()):.3e}")

    # Force the split-K (two-pass) reduction path with a tiny tile budget.
    for norm_type in ("instance", "layer"):
        y = jax.block_until_ready(
            norm_layer_forward(x, gamma, beta, norm_type, tile_budget=4096))
        y_ref = _reference(x, gamma, beta, norm_type)
        if not jnp.allclose(y, y_ref, atol=1e-4, rtol=1e-4):
            ok = False
            print(f"MISMATCH split-K {norm_type}: max err "
                  f"{float(jnp.abs(y - y_ref).max()):.3e}")

    # bf16 activations (exercises the dtype-aware sublane multiple).
    xb = x.astype(jnp.bfloat16)
    yb = jax.block_until_ready(norm_layer_forward(xb, gamma, beta, "instance"))
    yb_ref = _reference(xb, gamma, beta, "instance")
    if not jnp.allclose(yb.astype(jnp.float32), yb_ref, atol=5e-2, rtol=5e-2):
        ok = False
        print("MISMATCH bf16 instance: max err "
              f"{float(jnp.abs(yb.astype(jnp.float32) - yb_ref).max()):.3e}")

    if ok:
        print("KERNEL_OK")
</pallas_src>

<mosaic_0001>
module attributes {stable_mosaic.version = 11 : i64} {
  func.func @_batch_norm_kernel(%arg0: i32, %arg1: memref<2x4x256xf32, #tpu.memory_space<vmem>>, %arg2: memref<4x1xf32, #tpu.memory_space<vmem>>, %arg3: memref<4x1xf32, #tpu.memory_space<vmem>>, %arg4: memref<2x4x256xf32, #tpu.memory_space<vmem>>) attributes {dimension_semantics = [#tpu.dimension_semantics<parallel>], iteration_bounds = array<i64: 1>, scalar_prefetch = 0 : i64, scratch_operands = 0 : i64, tpu.core_type = #tpu.core_type<tc>, window_params = [{transform_indices = @transform_0, window_bounds = array<i64: 2, 4, 256>}, {transform_indices = @transform_1, window_bounds = array<i64: 4, 1>}, {transform_indices = @transform_2, window_bounds = array<i64: 4, 1>}, {transform_indices = @transform_3, window_bounds = array<i64: 2, 4, 256>}]} {
    %c0 = arith.constant 0 : index
    %c0_0 = arith.constant 0 : index
    %c0_1 = arith.constant 0 : index
    %0 = vector.load %arg1[%c0, %c0_0, %c0_1] : memref<2x4x256xf32, #tpu.memory_space<vmem>>, vector<2x4x256xf32>
    %cst = arith.constant dense<0.000000e+00> : vector<2x4xf32>
    %1 = vector.multi_reduction <add>, %0, %cst [2] : vector<2x4x256xf32> to vector<2x4xf32>
    %2 = vector.shape_cast %1 : vector<2x4xf32> to vector<2x4x1xf32>
    %3 = arith.mulf %0, %0 : vector<2x4x256xf32>
    %cst_2 = arith.constant dense<0.000000e+00> : vector<2x4xf32>
    %4 = vector.multi_reduction <add>, %3, %cst_2 [2] : vector<2x4x256xf32> to vector<2x4xf32>
    %5 = vector.shape_cast %4 : vector<2x4xf32> to vector<2x4x1xf32>
    %cst_3 = arith.constant dense<0.000000e+00> : vector<4x1xf32>
    %6 = vector.multi_reduction <add>, %2, %cst_3 [0] : vector<2x4x1xf32> to vector<4x1xf32>
    %7 = vector.shape_cast %6 : vector<4x1xf32> to vector<1x4x1xf32>
    %cst_4 = arith.constant 0.001953125 : f32
    %8 = vector.broadcast %cst_4 : f32 to vector<1x4x1xf32>
    %9 = arith.mulf %7, %8 : vector<1x4x1xf32>
    %cst_5 = arith.constant dense<0.000000e+00> : vector<4x1xf32>
    %10 = vector.multi_reduction <add>, %5, %cst_5 [0] : vector<2x4x1xf32> to vector<4x1xf32>
    %11 = vector.shape_cast %10 : vector<4x1xf32> to vector<1x4x1xf32>
    %cst_6 = arith.constant 0.001953125 : f32
    %12 = vector.broadcast %cst_6 : f32 to vector<1x4x1xf32>
    %13 = arith.mulf %11, %12 : vector<1x4x1xf32>
    %14 = arith.mulf %9, %9 : vector<1x4x1xf32>
    %15 = arith.subf %13, %14 : vector<1x4x1xf32>
    %cst_7 = arith.constant 0.000000e+00 : f32
    %16 = vector.broadcast %cst_7 : f32 to vector<1x4x1xf32>
    %17 = arith.maximumf %15, %16 : vector<1x4x1xf32>
    %c0_8 = arith.constant 0 : index
    %c0_9 = arith.constant 0 : index
    %18 = vector.load %arg2[%c0_8, %c0_9] : memref<4x1xf32, #tpu.memory_space<vmem>>, vector<4x1xf32>
    %19 = vector.shape_cast %18 : vector<4x1xf32> to vector<1x4x1xf32>
    %c0_10 = arith.constant 0 : index
    %c0_11 = arith.constant 0 : index
    %20 = vector.load %arg3[%c0_10, %c0_11] : memref<4x1xf32, #tpu.memory_space<vmem>>, vector<4x1xf32>
    %21 = vector.shape_cast %20 : vector<4x1xf32> to vector<1x4x1xf32>
    %cst_12 = arith.constant 9.99999974E-6 : f32
    %22 = vector.broadcast %cst_12 : f32 to vector<1x4x1xf32>
    %23 = arith.addf %17, %22 : vector<1x4x1xf32>
    %24 = math.rsqrt %23 : vector<1x4x1xf32>
    %25 = arith.mulf %24, %19 : vector<1x4x1xf32>
    %26 = vector.broadcast %9 : vector<1x4x1xf32> to vector<2x4x256xf32>
    %27 = arith.subf %0, %26 : vector<2x4x256xf32>
    %28 = vector.broadcast %25 : vector<1x4x1xf32> to vector<2x4x256xf32>
    %29 = arith.mulf %27, %28 : vector<2x4x256xf32>
    %30 = vector.broadcast %21 : vector<1x4x1xf32> to vector<2x4x256xf32>
    %31 = arith.addf %29, %30 : vector<2x4x256xf32>
    %c0_13 = arith.constant 0 : index
    %c0_14 = arith.constant 0 : index
    %c0_15 = arith.constant 0 : index
    %32 = vector.load %arg4[%c0_13, %c0_14, %c0_15] : memref<2x4x256xf32, #tpu.memory_space<vmem>>, vector<2x4x256xf32>
    tpu.vector_store %arg4[%c0_13, %c0_14, %c0_15], %31 {strides = array<i32>} : memref<2x4x256xf32, #tpu.memory_space<vmem>>, vector<2x4x256xf32>,
    return
  }
  func.func @transform_0(%arg0: i32) -> (i32, i32, i32) {
    %c0_i32 = arith.constant 0 : i32
    %c0_i32_0 = arith.constant 0 : i32
    %c0_i32_1 = arith.constant 0 : i32
    return %c0_i32, %arg0, %c0_i32_0 : i32, i32, i32
  }
  func.func @transform_1(%arg0: i32) -> (i32, i32) {
    %c0_i32 = arith.constant 0 : i32
    %c0_i32_0 = arith.constant 0 : i32
    return %arg0, %c0_i32 : i32, i32
  }
  func.func @transform_2(%arg0: i32) -> (i32, i32) {
    %c0_i32 = arith.constant 0 : i32
    %c0_i32_0 = arith.constant 0 : i32
    return %arg0, %c0_i32 : i32, i32
  }
  func.func @transform_3(%arg0: i32) -> (i32, i32, i32) {
    %c0_i32 = arith.constant 0 : i32
    %c0_i32_0 = arith.constant 0 : i32
    %c0_i32_1 = arith.constant 0 : i32
    return %c0_i32, %arg0, %c0_i32_0 : i32, i32, i32
  }
}

</mosaic_0001>

<llo_original>
// kernel: tpu_custom_call.1
$region0: #{tpu_custom_call.1}
  #allocation0 [shape = 'u32[]', space=smem, size = 0x4, offset = 0x4, fixed_abs, tag = 'smem constant byte address 0x4 - core index']
  #allocation1 [shape = 'u32[72,128]{1,0:T(1,128)}', space=vmem, size = 0x9000, scoped, tag = 'internal scratch']
  %s0 = inlined_call_operand.hbm [shape: f32[2,4,256], index: 0, kind: input, shape index: {}]
  %s1 = inlined_call_operand.vmem [shape: f32[4,1], index: 1, kind: input, shape index: {}]
  %s2 = inlined_call_operand.vmem [shape: f32[4,1], index: 2, kind: input, shape index: {}]
  %s3 = inlined_call_operand.hbm [shape: f32[2,4,256], index: 3, kind: output, shape index: {}]
  %s4 = sld [smem:[#allocation0]]
  $region26: #{tpu_custom_call.1} parent=0
    _
  %s6 = ssub.s32 1, %s4
  %s7 = scalar_select 0, %s6, %s4
  $region1: #{tpu_custom_call.1} parent=0
    #allocation2 [shape = 'u8[8192]{0}', space=vmem, size = 0x2000, scoped, tag = 'input window, operand 0, single buffered']
    #allocation3 [shape = 's32[1]{0}', space=sflag, size = 0x4, scoped, tag = 'scoped memory for tpu_custom_call.1']
    #allocation4 [shape = 's32[1]{0}', space=sflag, size = 0x4, scoped, tag = 'scoped memory for tpu_custom_call.1']
    #allocation5 [shape = 'u8[8192]{0}', space=vmem, size = 0x2000, scoped, tag = 'output window, operand 0, single buffered']
    %8 = vsyncpa [#allocation3], 0
    %9 = vsyncpa [#allocation4], 0
    // Predicated region
    $region2: #{tpu_custom_call.1} parent=1 // pred_check
      _
    $region3: #{tpu_custom_call.1} parent=1 // pred_check_branch
      %11 = sbr.rel (0) target = $region5
    $region4: #{tpu_custom_call.1} parent=1 // pred_region
      %13 = vsyncadd [#allocation3], 0
      %s14 = sshll.u32 %s0, 4
      %s15 = int_to_ptr.hbm [resolvable:$true] %s14
      %s16 = sshll.u32 [#allocation2], 4
      %s17 = int_to_ptr.vmem [resolvable:$true] %s16
      %22 = dma.hbm_to_vmem [thread:$0]  %s15, 256, %s17, [#allocation3], 128, 128, 8
    $region5: #{tpu_custom_call.1} parent=1 // pred_fallthru
      _
    // Predicated region
    $region6: #{tpu_custom_call.1} parent=1 // pred_check
      _
    $region7: #{tpu_custom_call.1} parent=1 // pred_check_branch
      %24 = sbr.rel (0) target = $region9
    $region8: #{tpu_custom_call.1} parent=1 // pred_region
      _
    $region9: #{tpu_custom_call.1} parent=1 // pred_fallthru
      _
    // Predicated region
    $region10: #{tpu_custom_call.1} parent=1 // pred_check
      _
    $region11: #{tpu_custom_call.1} parent=1 // pred_check_branch
      %26 = sbr.rel (0) target = $region13
    $region12: #{tpu_custom_call.1} parent=1 // pred_region
      _
    $region13: #{tpu_custom_call.1} parent=1 // pred_fallthru
      _
    // Predicated region
    $region14: #{tpu_custom_call.1} parent=1 // pred_check
      _
    $region15: #{tpu_custom_call.1} parent=1 // pred_check_branch
      %28 = sbr.rel (0) target = $region17
    $region16: #{tpu_custom_call.1} parent=1 // pred_region
      %30 = dma.done [#allocation3], 256
    $region17: #{tpu_custom_call.1} parent=1 // pred_fallthru
      _
    %v31 = vld [vmem:[#allocation2] sm:$0xff]
    %v32 = vld [vmem:[#allocation2 + $0x8] sm:$0xff]
    %35 = vst [vmem:[#allocation1] ss:$2 sm:$0xff] %v31
    %v36 = vld.sshfl [vmem:[#allocation1] sm:$0xff pattern:$0x75316420]
    %v37 = vld.sshfl [vmem:[#allocation1 + $0x8] sm:$0xff pattern:$0x75316420]
    %s38 = scalar_lea.vmem [#allocation1], 16
    %39 = vst [vmem:[%s38] ss:$2 sm:$0xff] %v32
    %v40 = vld.sshfl [vmem:[#allocation1 + $0x10] sm:$0xff pattern:$0x75316420]
    %v41 = vld.sshfl [vmem:[#allocation1 + $0x18] sm:$0xff pattern:$0x75316420]
    %vm46 = vcmask 1043456
    %v47 = vsel %vm46, %v36, 0.0
    %v48 = vsel %vm46, %v37, 0.0
    %v49 = vadd.f32 %v47, %v48
    %50 = vadd.xlane.f32.xlu0 %v49
    %v51 = vpop.xlane.xlu0 %50
    %v52 = vsel %vm46, %v40, 0.0
    %v53 = vsel %vm46, %v41, 0.0
    %v54 = vadd.f32 %v52, %v53
    %55 = vadd.xlane.f32.xlu0 %v54
    %v56 = vpop.xlane.xlu0 %55
    %v57 = vmul.f32 %v31, %v31
    %v58 = vmul.f32 %v32, %v32
    %61 = vst [vmem:[#allocation1] ss:$2 sm:$0xff] %v57
    %v62 = vld.sshfl [vmem:[#allocation1] sm:$0xff pattern:$0x75316420]
    %v63 = vld.sshfl [vmem:[#allocation1 + $0x8] sm:$0xff pattern:$0x75316420]
    %s64 = scalar_lea.vmem [#allocation1], 16
    %65 = vst [vmem:[%s64] ss:$2 sm:$0xff] %v58
    %v66 = vld.sshfl [vmem:[#allocation1 + $0x10] sm:$0xff pattern:$0x75316420]
    %v67 = vld.sshfl [vmem:[#allocation1 + $0x18] sm:$0xff pattern:$0x75316420]
    %v72 = vsel %vm46, %v62, 0.0
    %v73 = vsel %vm46, %v63, 0.0
    %v74 = vadd.f32 %v72, %v73
    %75 = vadd.xlane.f32.xlu0 %v74
    %v76 = vpop.xlane.xlu0 %75
    %v77 = vsel %vm46, %v66, 0.0
    %v78 = vsel %vm46, %v67, 0.0
    %v79 = vadd.f32 %v77, %v78
    %80 = vadd.xlane.f32.xlu0 %v79
    %v81 = vpop.xlane.xlu0 %80
    %v82 = vsel %vm46, %v51, 0.0
    %v83 = vsel %vm46, %v56, 0.0
    %v84 = vadd.f32 %v82, %v83
    %v85 = vmul.f32 %v84, 0.001953125
    %v86 = vsel %vm46, %v76, 0.0
    %v87 = vsel %vm46, %v81, 0.0
    %v88 = vadd.f32 %v86, %v87
    %v89 = vmul.f32 %v88, 0.001953125
    %v90 = vmul.f32 %v85, %v85
    %v91 = vsub.f32 %v89, %v90
    %v92 = vmax.f32 %v91, 0.0
    %v93 = vld [vmem:[%s1] sm:$0xf]
    %v94 = vld [vmem:[%s2] sm:$0xf]
    %v95 = vadd.f32 %v92, 1e-05
    %v96 = vrsqrt.pop %v95
    %v97 = vmul.f32 %v96, %v95
    %v98 = vmul.f32 %v97, %v96
    %v99 = vmul.f32 0.5, %v98
    %v100 = vsub.f32 1.5, %v99
    %v101 = vmul.f32 %v96, %v100
    %vm102 = vweird.f32 %v95
    %vm103 = vweird.f32 %v96
    %vm104 = vmor %vm102, %vm103
    %v105 = vsel %vm104, %v96, %v101
    %v106 = vmul.f32 %v105, %v93
    %v109 = vunpack.c.l.s4 839922192
    %v110 = vunpack.c.0.s8 %v109
    %v111 = vperm.slane %v85, %v110
    %v113 = vsub.f32 %v31, %v111
    %v114 = vsub.f32 %v32, %v111
    %116 = vset.pattern.permute.xlu0 0
    %117 = vperm.xlu0 %116, %v106
    %v118 = vpop.permute.xlu0 %117
    %v120 = vunpack.c.l.s4 839922192
    %v121 = vunpack.c.0.s8 %v120
    %v122 = vperm.slane %v118, %v121
    %v124 = vmul.f32 %v113, %v122
    %v125 = vmul.f32 %v114, %v122
    %127 = vset.pattern.permute.xlu0 0
    %128 = vperm.xlu0 %127, %v94
    %v129 = vpop.permute.xlu0 %128
    %v131 = vunpack.c.l.s4 839922192
    %v132 = vunpack.c.0.s8 %v131
    %v133 = vperm.slane %v129, %v132
    %v135 = vadd.f32 %v124, %v133
    %v136 = vadd.f32 %v125, %v133
    %137 = vst [vmem:[#allocation5] sm:$0xff] %v135
    %138 = vst [vmem:[#allocation5 + $0x8] sm:$0xff] %v136
    // Predicated region
    $region18: #{tpu_custom_call.1} parent=1 // pred_check
      _
    $region19: #{tpu_custom_call.1} parent=1 // pred_check_branch
      %140 = sbr.rel (0) target = $region21
    $region20: #{tpu_custom_call.1} parent=1 // pred_region
      %142 = vsyncadd [#allocation4], 0
      %s143 = sshll.u32 [#allocation5], 4
      %s144 = int_to_ptr.vmem [resolvable:$true] %s143
      %s145 = sshll.u32 %s3, 4
      %s146 = int_to_ptr.hbm [resolvable:$true] %s145
      %151 = dma.vmem_to_hbm [thread:$0]  %s144, 256, %s146, [#allocation4], 128, 128, 8
    $region21: #{tpu_custom_call.1} parent=1 // pred_fallthru
      _
    // Predicated region
    $region22: #{tpu_custom_call.1} parent=1 // pred_check
      _
    $region23: #{tpu_custom_call.1} parent=1 // pred_check_branch
      %153 = sbr.rel (0) target = $region25
    $region24: #{tpu_custom_call.1} parent=1 // pred_region
      %155 = dma.done [#allocation4], 256
    $region25: #{tpu_custom_call.1} parent=1 // pred_fallthru
      _
    %156 = vsyncpa [#allocation3], 1
    %157 = vsyncpa [#allocation4], 1

</llo_original>
